<compile_context>
chip_gen: v7x
topology: tpu7x:2x2x1
jax: 0.10.0
libtpu: 0.0.40
codegen_flags: <defaults>
</compile_context>

<pallas_src>
import jax
import jax.numpy as jnp
from jax import lax
from jax.experimental import pallas as pl
from jax.experimental.pallas import tpu as pltpu

LN_EPS = 1e-5  # torch.nn.LayerNorm default

# Set to jnp.bfloat16 on v6e/v7x for ~2x MXU throughput (accumulation stays
# f32, softmax/LayerNorm statistics stay f32). f32 preserves torch numerics.
MATMUL_DTYPE = jnp.float32

_VMEM_LIMIT = 32 * 1024 * 1024  # safe on v5e/v6e/v7x; raise for large D/F tiles


# ----------------------------- Pallas kernels ------------------------------

def _layer_norm(h, g, b):
    mean = jnp.mean(h, axis=-1, keepdims=True)
    var = jnp.mean(jnp.square(h - mean), axis=-1, keepdims=True)
    return (h - mean) * lax.rsqrt(var + LN_EPS) * g + b


def _qkv_kernel(x_ref, wq_ref, bq_ref, wk_ref, bk_ref, wv_ref, bv_ref,
                q_ref, k_ref, v_ref):
    # Fused Q/K/V projections: x tile read once, three lane-dense outputs.
    x = x_ref[...].astype(MATMUL_DTYPE)
    q_ref[...] = (jnp.dot(x, wq_ref[...].astype(MATMUL_DTYPE),
                          preferred_element_type=jnp.float32) + bq_ref[...])
    k_ref[...] = (jnp.dot(x, wk_ref[...].astype(MATMUL_DTYPE),
                          preferred_element_type=jnp.float32) + bk_ref[...])
    v_ref[...] = (jnp.dot(x, wv_ref[...].astype(MATMUL_DTYPE),
                          preferred_element_type=jnp.float32) + bv_ref[...])


def _sdpa_kernel(q_ref, k_ref, v_ref, ctx_ref, attn_ref):
    # One block of G heads per grid step: scaled dot-product attention.
    scale = 1.0 / jnp.sqrt(jnp.float32(q_ref.shape[-1]))
    q = (q_ref[...] * scale).astype(MATMUL_DTYPE)      # (G, L, Dh), scale folded in
    k = k_ref[...].astype(MATMUL_DTYPE)
    v = v_ref[...].astype(MATMUL_DTYPE)
    # Batched contraction over the last dims — no explicit transpose for the MXU.
    scores = lax.dot_general(q, k, (((2,), (2,)), ((0,), (0,))),
                             preferred_element_type=jnp.float32)  # (G, L, L)
    m = jnp.max(scores, axis=-1, keepdims=True)
    e = jnp.exp(scores - m)
    denom = jnp.sum(e, axis=-1, keepdims=True)
    attn = e * pl.reciprocal(denom, approx=True)        # softmax(dim=-1), EUP recip
    attn_ref[...] = attn
    ctx_ref[...] = lax.dot_general(attn.astype(MATMUL_DTYPE), v,
                                   (((2,), (1,)), ((0,), (0,))),
                                   preferred_element_type=jnp.float32)


def _tail_kernel(ctx_ref, x_ref, wo_ref, bo_ref, g1_ref, beta1_ref,
                 w1_ref, b1_ref, w2_ref, b2_ref, g2_ref, beta2_ref, o_ref):
    # Fused post-SDPA tail:
    #   h   = LayerNorm(residual + ctx @ Wo + bo)          (dropout p=0 skipped)
    #   out = LayerNorm(h + W2(relu(W1(h))))               (Conv1d k=1 == linear)
    ctx = ctx_ref[...].astype(MATMUL_DTYPE)
    y = (jnp.dot(ctx, wo_ref[...].astype(MATMUL_DTYPE),
                 preferred_element_type=jnp.float32) + bo_ref[...])
    h = _layer_norm(x_ref[...] + y, g1_ref[...], beta1_ref[...])
    ff = jnp.maximum(
        jnp.dot(h.astype(MATMUL_DTYPE), w1_ref[...].astype(MATMUL_DTYPE),
                preferred_element_type=jnp.float32) + b1_ref[...], 0.0)
    z = (jnp.dot(ff.astype(MATMUL_DTYPE), w2_ref[...].astype(MATMUL_DTYPE),
                 preferred_element_type=jnp.float32) + b2_ref[...])
    o_ref[...] = _layer_norm(h + z, g2_ref[...], beta2_ref[...])


# ----------------------------- pallas_call wrappers -------------------------

def _row_tile(n, tm=256):
    # Block second-last dim must be a multiple of 8 or equal the full extent.
    return n if n <= tm else tm


def _fixed_spec(shape):
    nd = len(shape)
    return pl.BlockSpec(shape, lambda i, _nd=nd: (0,) * _nd)


_DENSE_PARAMS = pltpu.CompilerParams(dimension_semantics=("parallel",),
                                     vmem_limit_bytes=_VMEM_LIMIT)


def pallas_qkv(x, wq, bq, wk, bk, wv, bv):
    n, d = x.shape
    tm = _row_tile(n)
    row = lambda i: (i, 0)
    out_sd = jax.ShapeDtypeStruct((n, d), jnp.float32)
    return pl.pallas_call(
        _qkv_kernel,
        out_shape=(out_sd, out_sd, out_sd),
        grid=(pl.cdiv(n, tm),),
        in_specs=[pl.BlockSpec((tm, d), row)]
                 + [_fixed_spec(w.shape) for w in (wq, bq, wk, bk, wv, bv)],
        out_specs=(pl.BlockSpec((tm, d), row),) * 3,
        compiler_params=_DENSE_PARAMS,
    )(x, wq, bq, wk, bk, wv, bv)


def _pick_head_block(bh, l, dh, budget_bytes=8 * 1024 * 1024):
    # G heads per step: q,k,v,ctx tiles + attn tile, f32, double-buffered.
    per_head = (4 * l * dh + l * l) * 4 * 2
    g = max(1, min(bh, budget_bytes // max(per_head, 1)))
    while bh % g:          # keep blocks an exact tiling of the head axis
        g -= 1
    return g


def pallas_sdpa(q, k, v):
    bh, l, dh = q.shape
    g = _pick_head_block(bh, l, dh)
    blk = lambda i: (i, 0, 0)
    return pl.pallas_call(
        _sdpa_kernel,
        out_shape=(jax.ShapeDtypeStruct((bh, l, dh), jnp.float32),
                   jax.ShapeDtypeStruct((bh, l, l), jnp.float32)),
        grid=(bh // g,),
        in_specs=[pl.BlockSpec((g, l, dh), blk) for _ in range(3)],
        out_specs=(pl.BlockSpec((g, l, dh), blk),
                   pl.BlockSpec((g, l, l), blk)),
        compiler_params=pltpu.CompilerParams(dimension_semantics=("parallel",),
                                             vmem_limit_bytes=_VMEM_LIMIT),
    )(q, k, v)


def pallas_attn_out_ffn(ctx, x, wo, bo, g1, beta1, w1, b1, w2, b2, g2, beta2):
    n, d = x.shape
    tm = _row_tile(n)
    row = lambda i: (i, 0)
    weights = (wo, bo, g1, beta1, w1, b1, w2, b2, g2, beta2)
    # TODO(synk): for real model sizes (D>=2048, F=4D) add a K-tiled reduction
    # grid axis + f32 VMEM accumulator for the FFN matmuls so resident weights
    # fit v7x's 64 MiB VMEM; unnecessary at these shapes.
    return pl.pallas_call(
        _tail_kernel,
        out_shape=jax.ShapeDtypeStruct((n, d), jnp.float32),
        grid=(pl.cdiv(n, tm),),
        in_specs=[pl.BlockSpec((tm, d), row), pl.BlockSpec((tm, d), row)]
                 + [_fixed_spec(w.shape) for w in weights],
        out_specs=pl.BlockSpec((tm, d), row),
        compiler_params=_DENSE_PARAMS,
    )(ctx, x, *weights)


# ----------------------------- encodeLayer forward --------------------------

def encode_layer_forward(x, p):
    """x: [B, L, D] -> (output [B, L, D], attention [B*H, L, L])."""
    B, L, D = x.shape
    H = p["num_heads"]
    Dh = D // H
    x2 = x.reshape(B * L, D)

    # ---- MultiHeadAttention(inputs, inputs, inputs, attn_mask=None) ----
    # TODO(synk): attn_mask path (masked_fill with -inf) not exercised; mask is None.
    q, k, v = pallas_qkv(x2, p["wq"], p["bq"], p["wk"], p["bk"], p["wv"], p["bv"])

    # torch: tensor.view(batch*num_heads, -1, dim_per_head)  == contiguous reshape
    qh = q.reshape(B * H, L, Dh)
    kh = k.reshape(B * H, L, Dh)
    vh = v.reshape(B * H, L, Dh)

    ctx, attention = pallas_sdpa(qh, kh, vh)
    ctx = ctx.reshape(B * L, D)

    # fused: output projection + dropout(p=0) + add&LayerNorm + FFN + add&LayerNorm
    out = pallas_attn_out_ffn(ctx, x2, p["wo"], p["bo"], p["ln1_g"], p["ln1_b"],
                              p["w1"], p["b1"], p["w2"], p["b2"],
                              p["ln2_g"], p["ln2_b"])
    return out.reshape(B, L, D), attention


def init_params(key, model_dim, num_heads, ffn_dim):
    ks = jax.random.split(key, 10)
    s = 0.05
    f32 = jnp.float32
    return {
        "num_heads": num_heads,
        "wq": jax.random.normal(ks[0], (model_dim, model_dim), f32) * s,
        "bq": jax.random.normal(ks[1], (1, model_dim), f32) * s,
        "wk": jax.random.normal(ks[2], (model_dim, model_dim), f32) * s,
        "bk": jax.random.normal(ks[3], (1, model_dim), f32) * s,
        "wv": jax.random.normal(ks[4], (model_dim, model_dim), f32) * s,
        "bv": jax.random.normal(ks[5], (1, model_dim), f32) * s,
        "wo": jax.random.normal(ks[6], (model_dim, model_dim), f32) * s,
        "bo": jnp.zeros((1, model_dim), f32),
        "ln1_g": jnp.ones((1, model_dim), f32),
        "ln1_b": jnp.zeros((1, model_dim), f32),
        # Conv1d(model_dim, ffn_dim, 1) -> weight used as [model_dim, ffn_dim]
        "w1": jax.random.normal(ks[7], (model_dim, ffn_dim), f32) * s,
        "b1": jnp.zeros((1, ffn_dim), f32),
        "w2": jax.random.normal(ks[8], (ffn_dim, model_dim), f32) * s,
        "b2": jnp.zeros((1, model_dim), f32),
        "ln2_g": jnp.ones((1, model_dim), f32),
        "ln2_b": jnp.zeros((1, model_dim), f32),
    }


# ----------------------------- pure-JAX reference ----------------------------

def _ref_forward(x, p):
    B, L, D = x.shape
    H = p["num_heads"]
    Dh = D // H
    x2 = x.reshape(B * L, D)
    q = x2 @ p["wq"] + p["bq"]
    k = x2 @ p["wk"] + p["bk"]
    v = x2 @ p["wv"] + p["bv"]
    qh, kh, vh = (t.reshape(B * H, L, Dh) for t in (q, k, v))
    scores = jnp.einsum("bqd,bkd->bqk", qh, kh) / jnp.sqrt(jnp.float32(Dh))
    attn = jax.nn.softmax(scores, axis=-1)
    ctx = jnp.einsum("bqk,bkd->bqd", attn, vh).reshape(B * L, D)

    def ln(h, g, b):
        m = jnp.mean(h, -1, keepdims=True)
        var = jnp.mean(jnp.square(h - m), -1, keepdims=True)
        return (h - m) / jnp.sqrt(var + LN_EPS) * g + b

    h1 = ln(x2 + ctx @ p["wo"] + p["bo"], p["ln1_g"], p["ln1_b"])
    ff = jnp.maximum(h1 @ p["w1"] + p["b1"], 0.0) @ p["w2"] + p["b2"]
    out = ln(h1 + ff, p["ln2_g"], p["ln2_b"])
    return out.reshape(B, L, D), attn


if __name__ == "__main__":
    B, L, model_dim, num_heads, ffn_dim = 2, 8, 32, 4, 64

    key = jax.random.PRNGKey(0)
    k_x, k_p = jax.random.split(key)
    x = jax.random.normal(k_x, (B, L, model_dim), jnp.float32)
    params = init_params(k_p, model_dim, num_heads, ffn_dim)

    out, attn = encode_layer_forward(x, params)
    jax.block_until_ready((out, attn))

    assert out.shape == (B, L, model_dim)
    assert attn.shape == (B * num_heads, L, L)

    ref_out, ref_attn = _ref_forward(x, params)
    assert jnp.max(jnp.abs(out - ref_out)) < 1e-2, "output mismatch vs reference"
    assert jnp.max(jnp.abs(attn - ref_attn)) < 1e-2, "attention mismatch vs reference"
    print("KERNEL_OK")
</pallas_src>

<mosaic_0001>
module attributes {stable_mosaic.version = 11 : i64} {
  func.func @_qkv_kernel(%arg0: i32, %arg1: memref<16x32xf32, #tpu.memory_space<vmem>>, %arg2: memref<32x32xf32, #tpu.memory_space<vmem>>, %arg3: memref<1x32xf32, #tpu.memory_space<vmem>>, %arg4: memref<32x32xf32, #tpu.memory_space<vmem>>, %arg5: memref<1x32xf32, #tpu.memory_space<vmem>>, %arg6: memref<32x32xf32, #tpu.memory_space<vmem>>, %arg7: memref<1x32xf32, #tpu.memory_space<vmem>>, %arg8: memref<16x32xf32, #tpu.memory_space<vmem>>, %arg9: memref<16x32xf32, #tpu.memory_space<vmem>>, %arg10: memref<16x32xf32, #tpu.memory_space<vmem>>) attributes {dimension_semantics = [#tpu.dimension_semantics<parallel>], iteration_bounds = array<i64: 1>, scalar_prefetch = 0 : i64, scratch_operands = 0 : i64, tpu.core_type = #tpu.core_type<tc>, window_params = [{transform_indices = @transform_0, window_bounds = array<i64: 16, 32>}, {pipeline_mode = #tpu.pipeline_mode<synchronous>, transform_indices = @transform_1, window_bounds = array<i64: 32, 32>}, {pipeline_mode = #tpu.pipeline_mode<synchronous>, transform_indices = @transform_2, window_bounds = array<i64: 1, 32>}, {pipeline_mode = #tpu.pipeline_mode<synchronous>, transform_indices = @transform_3, window_bounds = array<i64: 32, 32>}, {pipeline_mode = #tpu.pipeline_mode<synchronous>, transform_indices = @transform_4, window_bounds = array<i64: 1, 32>}, {pipeline_mode = #tpu.pipeline_mode<synchronous>, transform_indices = @transform_5, window_bounds = array<i64: 32, 32>}, {pipeline_mode = #tpu.pipeline_mode<synchronous>, transform_indices = @transform_6, window_bounds = array<i64: 1, 32>}, {transform_indices = @transform_7, window_bounds = array<i64: 16, 32>}, {transform_indices = @transform_8, window_bounds = array<i64: 16, 32>}, {transform_indices = @transform_9, window_bounds = array<i64: 16, 32>}]} {
    %c0 = arith.constant 0 : index
    %c0_0 = arith.constant 0 : index
    %0 = vector.load %arg1[%c0, %c0_0] : memref<16x32xf32, #tpu.memory_space<vmem>>, vector<16x32xf32>
    %c0_1 = arith.constant 0 : index
    %c0_2 = arith.constant 0 : index
    %1 = vector.load %arg2[%c0_1, %c0_2] : memref<32x32xf32, #tpu.memory_space<vmem>>, vector<32x32xf32>
    %cst = arith.constant dense<0.000000e+00> : vector<16x32xf32>
    %2 = tpu.matmul %0, %1, %cst {dimension_numbers = #tpu.dot_dimension_numbers<[1], [0], [0], [1], [0, 0, 1, 1], [], []>} : vector<16x32xf32>, vector<32x32xf32>, vector<16x32xf32> -> vector<16x32xf32>
    %c0_3 = arith.constant 0 : index
    %c0_4 = arith.constant 0 : index
    %3 = vector.load %arg3[%c0_3, %c0_4] : memref<1x32xf32, #tpu.memory_space<vmem>>, vector<1x32xf32>
    %4 = vector.broadcast %3 : vector<1x32xf32> to vector<16x32xf32>
    %5 = arith.addf %2, %4 : vector<16x32xf32>
    %c0_5 = arith.constant 0 : index
    %c0_6 = arith.constant 0 : index
    %6 = vector.load %arg8[%c0_5, %c0_6] : memref<16x32xf32, #tpu.memory_space<vmem>>, vector<16x32xf32>
    tpu.vector_store %arg8[%c0_5, %c0_6], %5 {strides = array<i32>} : memref<16x32xf32, #tpu.memory_space<vmem>>, vector<16x32xf32>,
    %c0_7 = arith.constant 0 : index
    %c0_8 = arith.constant 0 : index
    %7 = vector.load %arg4[%c0_7, %c0_8] : memref<32x32xf32, #tpu.memory_space<vmem>>, vector<32x32xf32>
    %cst_9 = arith.constant dense<0.000000e+00> : vector<16x32xf32>
    %8 = tpu.matmul %0, %7, %cst_9 {dimension_numbers = #tpu.dot_dimension_numbers<[1], [0], [0], [1], [0, 0, 1, 1], [], []>} : vector<16x32xf32>, vector<32x32xf32>, vector<16x32xf32> -> vector<16x32xf32>
    %c0_10 = arith.constant 0 : index
    %c0_11 = arith.constant 0 : index
    %9 = vector.load %arg5[%c0_10, %c0_11] : memref<1x32xf32, #tpu.memory_space<vmem>>, vector<1x32xf32>
    %10 = vector.broadcast %9 : vector<1x32xf32> to vector<16x32xf32>
    %11 = arith.addf %8, %10 : vector<16x32xf32>
    %c0_12 = arith.constant 0 : index
    %c0_13 = arith.constant 0 : index
    %12 = vector.load %arg9[%c0_12, %c0_13] : memref<16x32xf32, #tpu.memory_space<vmem>>, vector<16x32xf32>
    tpu.vector_store %arg9[%c0_12, %c0_13], %11 {strides = array<i32>} : memref<16x32xf32, #tpu.memory_space<vmem>>, vector<16x32xf32>,
    %c0_14 = arith.constant 0 : index
    %c0_15 = arith.constant 0 : index
    %13 = vector.load %arg6[%c0_14, %c0_15] : memref<32x32xf32, #tpu.memory_space<vmem>>, vector<32x32xf32>
    %cst_16 = arith.constant dense<0.000000e+00> : vector<16x32xf32>
    %14 = tpu.matmul %0, %13, %cst_16 {dimension_numbers = #tpu.dot_dimension_numbers<[1], [0], [0], [1], [0, 0, 1, 1], [], []>} : vector<16x32xf32>, vector<32x32xf32>, vector<16x32xf32> -> vector<16x32xf32>
    %c0_17 = arith.constant 0 : index
    %c0_18 = arith.constant 0 : index
    %15 = vector.load %arg7[%c0_17, %c0_18] : memref<1x32xf32, #tpu.memory_space<vmem>>, vector<1x32xf32>
    %16 = vector.broadcast %15 : vector<1x32xf32> to vector<16x32xf32>
    %17 = arith.addf %14, %16 : vector<16x32xf32>
    %c0_19 = arith.constant 0 : index
    %c0_20 = arith.constant 0 : index
    %18 = vector.load %arg10[%c0_19, %c0_20] : memref<16x32xf32, #tpu.memory_space<vmem>>, vector<16x32xf32>
    tpu.vector_store %arg10[%c0_19, %c0_20], %17 {strides = array<i32>} : memref<16x32xf32, #tpu.memory_space<vmem>>, vector<16x32xf32>,
    return
  }
  func.func @transform_0(%arg0: i32) -> (i32, i32) {
    %c0_i32 = arith.constant 0 : i32
    %c0_i32_0 = arith.constant 0 : i32
    return %arg0, %c0_i32 : i32, i32
  }
  func.func @transform_1(%arg0: i32) -> (i32, i32) {
    %c0_i32 = arith.constant 0 : i32
    %c0_i32_0 = arith.constant 0 : i32
    %c0_i32_1 = arith.constant 0 : i32
    return %c0_i32, %c0_i32_0 : i32, i32
  }
  func.func @transform_2(%arg0: i32) -> (i32, i32) {
    %c0_i32 = arith.constant 0 : i32
    %c0_i32_0 = arith.constant 0 : i32
    %c0_i32_1 = arith.constant 0 : i32
    return %c0_i32, %c0_i32_0 : i32, i32
  }
  func.func @transform_3(%arg0: i32) -> (i32, i32) {
    %c0_i32 = arith.constant 0 : i32
    %c0_i32_0 = arith.constant 0 : i32
    %c0_i32_1 = arith.constant 0 : i32
    return %c0_i32, %c0_i32_0 : i32, i32
  }
  func.func @transform_4(%arg0: i32) -> (i32, i32) {
    %c0_i32 = arith.constant 0 : i32
    %c0_i32_0 = arith.constant 0 : i32
    %c0_i32_1 = arith.constant 0 : i32
    return %c0_i32, %c0_i32_0 : i32, i32
  }
  func.func @transform_5(%arg0: i32) -> (i32, i32) {
    %c0_i32 = arith.constant 0 : i32
    %c0_i32_0 = arith.constant 0 : i32
    %c0_i32_1 = arith.constant 0 : i32
    return %c0_i32, %c0_i32_0 : i32, i32
  }
  func.func @transform_6(%arg0: i32) -> (i32, i32) {
    %c0_i32 = arith.constant 0 : i32
    %c0_i32_0 = arith.constant 0 : i32
    %c0_i32_1 = arith.constant 0 : i32
    return %c0_i32, %c0_i32_0 : i32, i32
  }
  func.func @transform_7(%arg0: i32) -> (i32, i32) {
    %c0_i32 = arith.constant 0 : i32
    %c0_i32_0 = arith.constant 0 : i32
    return %arg0, %c0_i32 : i32, i32
  }
  func.func @transform_8(%arg0: i32) -> (i32, i32) {
    %c0_i32 = arith.constant 0 : i32
    %c0_i32_0 = arith.constant 0 : i32
    return %arg0, %c0_i32 : i32, i32
  }
  func.func @transform_9(%arg0: i32) -> (i32, i32) {
    %c0_i32 = arith.constant 0 : i32
    %c0_i32_0 = arith.constant 0 : i32
    return %arg0, %c0_i32 : i32, i32
  }
}

</mosaic_0001>

<llo_original>
// kernel: tpu_custom_call.1
$region0: #{tpu_custom_call.1}
  #allocation0 [shape = 'u32[]', space=smem, size = 0x4, offset = 0x4, fixed_abs, tag = 'smem constant byte address 0x4 - core index']
  #allocation1 [shape = 'u32[144,128]{1,0:T(1,128)}', space=vmem, size = 0x12000, scoped, tag = 'internal scratch']
  %s0 = inlined_call_operand.hbm [shape: f32[16,32], index: 0, kind: input, shape index: {}]
  %s1 = inlined_call_operand.hbm [shape: f32[32,32], index: 1, kind: input, shape index: {}]
  %s2 = inlined_call_operand.vmem [shape: f32[1,32], index: 2, kind: input, shape index: {}]
  %s3 = inlined_call_operand.hbm [shape: f32[32,32], index: 3, kind: input, shape index: {}]
  %s4 = inlined_call_operand.vmem [shape: f32[1,32], index: 4, kind: input, shape index: {}]
  %s5 = inlined_call_operand.hbm [shape: f32[32,32], index: 5, kind: input, shape index: {}]
  %s6 = inlined_call_operand.vmem [shape: f32[1,32], index: 6, kind: input, shape index: {}]
  %s7 = inlined_call_operand.hbm [shape: f32[16,32], index: 7, kind: output, shape index: {0}]
  %s8 = inlined_call_operand.hbm [shape: f32[16,32], index: 8, kind: output, shape index: {1}]
  %s9 = inlined_call_operand.hbm [shape: f32[16,32], index: 9, kind: output, shape index: {2}]
  %10 = xla_tuple %s7, %s8, %s9
  %s11 = sld [smem:[#allocation0]]
  $region70: #{tpu_custom_call.1} parent=0
    _
  %s13 = ssub.s32 1, %s11
  %s14 = scalar_select 0, %s13, %s11
  $region1: #{tpu_custom_call.1} parent=0
    #allocation2 [shape = 'u8[8192]{0}', space=vmem, size = 0x2000, scoped, tag = 'input window, operand 0, single buffered']
    #allocation3 [shape = 's32[1]{0}', space=sflag, size = 0x4, scoped, tag = 'scoped memory for tpu_custom_call.1']
    #allocation4 [shape = 's32[1]{0}', space=sflag, size = 0x4, scoped, tag = 'scoped memory for tpu_custom_call.1']
    #allocation5 [shape = 'u8[16384]{0}', space=vmem, size = 0x4000, scoped, tag = 'input window, operand 1, single buffered']
    #allocation6 [shape = 's32[1]{0}', space=sflag, size = 0x4, scoped, tag = 'scoped memory for tpu_custom_call.1']
    #allocation7 [shape = 'u8[16384]{0}', space=vmem, size = 0x4000, scoped, tag = 'input window, operand 3, single buffered']
    #allocation8 [shape = 'u8[16384]{0}', space=vmem, size = 0x4000, scoped, tag = 'input window, operand 5, single buffered']
    #allocation9 [shape = 's32[1]{0}', space=sflag, size = 0x4, scoped, tag = 'scoped memory for tpu_custom_call.1']
    #allocation10 [shape = 'u8[8192]{0}', space=vmem, size = 0x2000, scoped, tag = 'output window, operand 0, single buffered']
    #allocation11 [shape = 'u8[8192]{0}', space=vmem, size = 0x2000, scoped, tag = 'output window, operand 1, single buffered']
    #allocation12 [shape = 's32[1]{0}', space=sflag, size = 0x4, scoped, tag = 'scoped memory for tpu_custom_call.1']
    #allocation13 [shape = 'u8[8192]{0}', space=vmem, size = 0x2000, scoped, tag = 'output window, operand 2, single buffered']
    %15 = vsyncpa [#allocation3], 0
    %16 = vsyncpa [#allocation6], 0
    %17 = vsyncpa [#allocation9], 0
    %18 = vsyncpa [#allocation4], 0
    %19 = vsyncpa [#allocation12], 0
    // Predicated region
    $region2: #{tpu_custom_call.1} parent=1 // pred_check
      _
    $region3: #{tpu_custom_call.1} parent=1 // pred_check_branch
      %21 = sbr.rel (0) target = $region5
    $region4: #{tpu_custom_call.1} parent=1 // pred_region
      %s23 = ssub.s32 256, 256
      %24 = vsyncadd [#allocation3], %s23
      %s25 = sshll.u32 [#allocation2], 4
      %s26 = int_to_ptr.vmem [resolvable:$true] %s25
      %31 = dma.hbm_to_vmem [thread:$0]  %s0, 256, %s26, [#allocation3], 128, 128, 8
    $region5: #{tpu_custom_call.1} parent=1 // pred_fallthru
      _
    // Predicated region
    $region6: #{tpu_custom_call.1} parent=1 // pred_check
      _
    $region7: #{tpu_custom_call.1} parent=1 // pred_check_branch
      %33 = sbr.rel (0) target = $region9
    $region8: #{tpu_custom_call.1} parent=1 // pred_region
      %s35 = ssub.s32 512, 512
      %36 = vsyncadd [#allocation6], %s35
      %s37 = sshll.u32 [#allocation5], 4
      %s38 = int_to_ptr.vmem [resolvable:$true] %s37
      %43 = dma.hbm_to_vmem [thread:$0]  %s1, 512, %s38, [#allocation6], 128, 128, 8
    $region9: #{tpu_custom_call.1} parent=1 // pred_fallthru
      _
    // Predicated region
    $region10: #{tpu_custom_call.1} parent=1 // pred_check
      _
    $region11: #{tpu_custom_call.1} parent=1 // pred_check_branch
      %45 = sbr.rel (0) target = $region13
    $region12: #{tpu_custom_call.1} parent=1 // pred_region
      _
    $region13: #{tpu_custom_call.1} parent=1 // pred_fallthru
      _
    // Predicated region
    $region14: #{tpu_custom_call.1} parent=1 // pred_check
      _
    $region15: #{tpu_custom_call.1} parent=1 // pred_check_branch
      %47 = sbr.rel (0) target = $region17
    $region16: #{tpu_custom_call.1} parent=1 // pred_region
      %s49 = ssub.s32 512, 512
      %50 = vsyncadd [#allocation6], %s49
      %s51 = sshll.u32 [#allocation7], 4
      %s52 = int_to_ptr.vmem [resolvable:$true] %s51
      %57 = dma.hbm_to_vmem [thread:$0]  %s3, 512, %s52, [#allocation6], 128, 128, 8
    $region17: #{tpu_custom_call.1} parent=1 // pred_fallthru
      _
    // Predicated region
    $region18: #{tpu_custom_call.1} parent=1 // pred_check
      _
    $region19: #{tpu_custom_call.1} parent=1 // pred_check_branch
      %59 = sbr.rel (0) target = $region21
    $region20: #{tpu_custom_call.1} parent=1 // pred_region
      _
    $region21: #{tpu_custom_call.1} parent=1 // pred_fallthru
      _
    // Predicated region
    $region22: #{tpu_custom_call.1} parent=1 // pred_check
      _
    $region23: #{tpu_custom_call.1} parent=1 // pred_check_branch
      %61 = sbr.rel (0) target = $region25
    $region24: #{tpu_custom_call.1} parent=1 // pred_region
      %s63 = ssub.s32 512, 512
      %64 = vsyncadd [#allocation9], %s63
      %s65 = sshll.u32 [#allocation8], 4
      %s66 = int_to_ptr.vmem [resolvable:$true] %s65
      %71 = dma.hbm_to_vmem [thread:$0]  %s5, 512, %s66, [#allocation9], 128, 128, 8
    $region25: #{tpu_custom_call.1} parent=1 // pred_fallthru
      _
    // Predicated region
    $region26: #{tpu_custom_call.1} parent=1 // pred_check
      _
    $region27: #{tpu_custom_call.1} parent=1 // pred_check_branch
      %73 = sbr.rel (0) target = $region29
    $region28: #{tpu_custom_call.1} parent=1 // pred_region
      _
    $region29: #{tpu_custom_call.1} parent=1 // pred_fallthru
      _
    // Predicated region
    $region30: #{tpu_custom_call.1} parent=1 // pred_check
      _
    $region31: #{tpu_custom_call.1} parent=1 // pred_check_branch
      %75 = sbr.rel (0) target = $region33
    $region32: #{tpu_custom_call.1} parent=1 // pred_region
      %76 = dma.done [#allocation3], 256
    $region33: #{tpu_custom_call.1} parent=1 // pred_fallthru
      _
    // Predicated region
    $region34: #{tpu_custom_call.1} parent=1 // pred_check
      _
    $region35: #{tpu_custom_call.1} parent=1 // pred_check_branch
      %78 = sbr.rel (0) target = $region37
    $region36: #{tpu_custom_call.1} parent=1 // pred_region
      %79 = dma.done [#allocation6], 512
    $region37: #{tpu_custom_call.1} parent=1 // pred_fallthru
      _
    // Predicated region
    $region38: #{tpu_custom_call.1} parent=1 // pred_check
      _
    $region39: #{tpu_custom_call.1} parent=1 // pred_check_branch
      %81 = sbr.rel (0) target = $region41
    $region40: #{tpu_custom_call.1} parent=1 // pred_region
      %82 = dma.done [#allocation6], 512
    $region41: #{tpu_custom_call.1} parent=1 // pred_fallthru
      _
    // Predicated region
    $region42: #{tpu_custom_call.1} parent=1 // pred_check
      _
    $region43: #{tpu_custom_call.1} parent=1 // pred_check_branch
      %84 = sbr.rel (0) target = $region45
    $region44: #{tpu_custom_call.1} parent=1 // pred_region
      %85 = dma.done [#allocation9], 512
    $region45: #{tpu_custom_call.1} parent=1 // pred_fallthru
      _
    %v86 = vld [vmem:[#allocation2] sm:$0xff]
    %v87 = vld [vmem:[#allocation2 + $0x8] sm:$0xff]
    %v88 = vld [vmem:[#allocation5] sm:$0xff]
    %v89 = vld [vmem:[#allocation5 + $0x8] sm:$0xff]
    %v90 = vld [vmem:[#allocation5 + $0x10] sm:$0xff]
    %v91 = vld [vmem:[#allocation5 + $0x18] sm:$0xff]
    %v92 = vld [vmem:[%s2] sm:$0x1]
    %v94 = vlaneseq
    %v95 = vshrl.u32 %v94, 7
    %v96 = vsub.s32 0, %v95
    %v97 = vrot.slane %v92, %v96
    %vm99 = vcmask 261120
    %v101 = vsel %vm99, %v86, 0
    %v104 = vsel %vm99, %v87, 0
    %106 = vmatprep.subr.mxu0 0.0
    %107 = vmatpush1.msra.mxu0 %v88
    %108 = vmatprep.subr.mxu0 0.0
    %109 = vmatpush1.msra.mxu0 %v89
    %110 = vmatprep.subr.mxu0 0.0
    %111 = vmatpush1.msra.mxu0 %v90
    %112 = vmatprep.subr.mxu0 0.0
    %113 = vmatpush1.msra.mxu0 %v91
    %114 = vmatprep.subr.mxu0 0.0
    %115 = vmatpush1.msra.mxu0 0.0
    %116 = vmatprep.subr.mxu0 0.0
    %117 = vmatpush1.msra.mxu0 0.0
    %118 = vmatprep.subr.mxu0 0.0
    %119 = vmatpush1.msra.mxu0 0.0
    %120 = vmatprep.subr.mxu0 0.0
    %121 = vmatpush1.msra.mxu0 0.0
    %122 = vmatprep.subr.mxu0 0.0
    %123 = vmatpush1.msra.mxu0 0.0
    %124 = vmatprep.subr.mxu0 0.0
    %125 = vmatpush1.msra.mxu0 0.0
    %126 = vmatprep.subr.mxu0 0.0
    %127 = vmatpush1.msra.mxu0 0.0
    %128 = vmatprep.subr.mxu0 0.0
    %129 = vmatpush1.msra.mxu0 0.0
    %130 = vmatprep.subr.mxu0 0.0
    %131 = vmatpush1.msra.mxu0 0.0
    %132 = vmatprep.subr.mxu0 0.0
    %133 = vmatpush1.msra.mxu0 0.0
    %134 = vmatprep.subr.mxu0 0.0
    %135 = vmatpush1.msra.mxu0 0.0
    %136 = vmatprep.subr.mxu0 0.0
    %137 = vmatpush1.msra.mxu0 0.0
    %138 = vmatprep.subr.mxu0 0.0
    %139 = vmatpush1.msra.mxu0 0.0
    %140 = vmatprep.subr.mxu0 0.0
    %141 = vmatpush1.msra.mxu0 0.0
    %142 = vmatprep.subr.mxu0 0.0
    %143 = vmatpush1.msra.mxu0 0.0
    %144 = vmatprep.subr.mxu0 0.0
    %145 = vmatpush1.msra.mxu0 0.0
    %146 = vmatprep.subr.mxu0 0.0
    %147 = vmatpush1.msra.mxu0 0.0
    %148 = vmatprep.subr.mxu0 0.0
    %149 = vmatpush1.msra.mxu0 0.0
    %150 = vmatprep.subr.mxu0 0.0
    %151 = vmatpush1.msra.mxu0 0.0
    %152 = vmatprep.subr.mxu0 0.0
    %153 = vmatpush1.msra.mxu0 0.0
    %154 = vmatprep.subr.mxu0 0.0
    %155 = vmatpush1.msra.mxu0 0.0
    %156 = vmatprep.subr.mxu0 0.0
    %157 = vmatpush1.msra.mxu0 0.0
    %158 = vmatprep.subr.mxu0 0.0
    %159 = vmatpush1.msra.mxu0 0.0
    %160 = vmatprep.subr.mxu0 0.0
    %161 = vmatpush1.msra.mxu0 0.0
    %162 = vmatprep.subr.mxu0 0.0
    %163 = vmatpush1.msra.mxu0 0.0
    %164 = vmatprep.subr.mxu0 0.0
    %165 = vmatpush1.msra.mxu0 0.0
    %166 = vmatprep.subr.mxu0 0.0
    %167 = vmatpush1.msra.mxu0 0.0
    %168 = vmatprep.subr.mxu0 0.0
    %169 = vmatpush1.msra.mxu0 0.0
    %170 = vmatprep.mubr.f32.mxu0 0.0
    %171 = vmatmul.mubr.f32.gmra.mrb[0].mxu0 %v101
    %v172 = vpop.f32.mrb[0].mxu0
    %v173 = vadd.f32 %v97, %v172
    %v174 = vpop.f32.mrb[0].mxu0
    %175 = vmatprep.mubr.f32.mxu0 0.0
    %176 = vmatmul.mubr.f32.gmra.mrb[0].mxu0 %v104
    %v177 = vpop.f32.mrb[0].mxu0
    %v178 = vadd.f32 %v97, %v177
    %v179 = vpop.f32.mrb[0].mxu0
    %180 = vdwg.mxu0
    %181 = vst.msk [vmem:[#allocation10] sm:$0xff] %vm99, %v173
    %182 = vst.msk [vmem:[#allocation10 + $0x8] sm:$0xff] %vm99, %v178
    %v183 = vld [vmem:[#allocation7] sm:$0xff]
    %v184 = vld [vmem:[#allocation7 + $0x8] sm:$0xff]
    %v185 = vld [vmem:[#allocation7 + $0x10] sm:$0xff]
    %v186 = vld [vmem:[#allocation7 + $0x18] sm:$0xff]
    %v187 = vld [vmem:[%s4] sm:$0x1]
    %v189 = vlaneseq
    %v190 = vshrl.u32 %v189, 7
    %v191 = vsub.s32 0, %v190
    %v192 = vrot.slane %v187, %v191
    %194 = vmatprep.subr.mxu0 0.0
    %195 = vmatpush1.msra.mxu0 %v183
    %196 = vmatprep.subr.mxu0 0.0
    %197 = vmatpush1.msra.mxu0 %v184
    %198 = vmatprep.subr.mxu0 0.0
    %199 = vmatpush1.msra.mxu0 %v185
    %200 = vmatprep.subr.mxu0 0.0
    %201 = vmatpush1.msra.mxu0 %v186
    %202 = vmatprep.subr.mxu0 0.0
    %203 = vmatpush1.msra.mxu0 0.0
    %204 = vmatprep.subr.mxu0 0.0
    %205 = vmatpush1.msra.mxu0 0.0
    %206 = vmatprep.subr.mxu0 0.0
    %207 = vmatpush1.msra.mxu0 0.0
    %208 = vmatprep.subr.mxu0 0.0
    %209 = vmatpush1.msra.mxu0 0.0
    %210 = vmatprep.subr.mxu0 0.0
    %211 = vmatpush1.msra.mxu0 0.0
    %212 = vmatprep.subr.mxu0 0.0
    %213 = vmatpush1.msra.mxu0 0.0
    %214 = vmatprep.subr.mxu0 0.0
    %215 = vmatpush1.msra.mxu0 0.0
    %216 = vmatprep.subr.mxu0 0.0
    %217 = vmatpush1.msra.mxu0 0.0
    %218 = vmatprep.subr.mxu0 0.0
    %219 = vmatpush1.msra.mxu0 0.0
    %220 = vmatprep.subr.mxu0 0.0
    %221 = vmatpush1.msra.mxu0 0.0
    %222 = vmatprep.subr.mxu0 0.0
    %223 = vmatpush1.msra.mxu0 0.0
    %224 = vmatprep.subr.mxu0 0.0
    %225 = vmatpush1.msra.mxu0 0.0
    %226 = vmatprep.subr.mxu0 0.0
    %227 = vmatpush1.msra.mxu0 0.0
    %228 = vmatprep.subr.mxu0 0.0
    %229 = vmatpush1.msra.mxu0 0.0
    %230 = vmatprep.subr.mxu0 0.0
    %231 = vmatpush1.msra.mxu0 0.0
    %232 = vmatprep.subr.mxu0 0.0
    %233 = vmatpush1.msra.mxu0 0.0
    %234 = vmatprep.subr.mxu0 0.0
    %235 = vmatpush1.msra.mxu0 0.0
    %236 = vmatprep.subr.mxu0 0.0
    %237 = vmatpush1.msra.mxu0 0.0
    %238 = vmatprep.subr.mxu0 0.0
    %239 = vmatpush1.msra.mxu0 0.0
    %240 = vmatprep.subr.mxu0 0.0
    %241 = vmatpush1.msra.mxu0 0.0
    %242 = vmatprep.subr.mxu0 0.0
    %243 = vmatpush1.msra.mxu0 0.0
    %244 = vmatprep.subr.mxu0 0.0
    %245 = vmatpush1.msra.mxu0 0.0
    %246 = vmatprep.subr.mxu0 0.0
    %247 = vmatpush1.msra.mxu0 0.0
    %248 = vmatprep.subr.mxu0 0.0
    %249 = vmatpush1.msra.mxu0 0.0
    %250 = vmatprep.subr.mxu0 0.0
    %251 = vmatpush1.msra.mxu0 0.0
    %252 = vmatprep.subr.mxu0 0.0
    %253 = vmatpush1.msra.mxu0 0.0
    %254 = vmatprep.subr.mxu0 0.0
    %255 = vmatpush1.msra.mxu0 0.0
    %256 = vmatprep.subr.mxu0 0.0
    %257 = vmatpush1.msra.mxu0 0.0
    %258 = vmatprep.mubr.f32.mxu0 0.0
    %259 = vmatmul.mubr.f32.gmra.mrb[0].mxu0 %v101
    %v260 = vpop.f32.mrb[0].mxu0
    %v261 = vadd.f32 %v192, %v260
    %v262 = vpop.f32.mrb[0].mxu0
    %263 = vmatprep.mubr.f32.mxu0 0.0
    %264 = vmatmul.mubr.f32.gmra.mrb[0].mxu0 %v104
    %v265 = vpop.f32.mrb[0].mxu0
    %v266 = vadd.f32 %v192, %v265
    %v267 = vpop.f32.mrb[0].mxu0
    %268 = vdwg.mxu0
    %269 = vst.msk [vmem:[#allocation11] sm:$0xff] %vm99, %v261
    %270 = vst.msk [vmem:[#allocation11 + $0x8] sm:$0xff] %vm99, %v266
    %v271 = vld [vmem:[#allocation8] sm:$0xff]
    %v272 = vld [vmem:[#allocation8 + $0x8] sm:$0xff]
    %v273 = vld [vmem:[#allocation8 + $0x10] sm:$0xff]
    %v274 = vld [vmem:[#allocation8 + $0x18] sm:$0xff]
    %v275 = vld [vmem:[%s6] sm:$0x1]
    %v277 = vlaneseq
    %v278 = vshrl.u32 %v277, 7
    %v279 = vsub.s32 0, %v278
    %v280 = vrot.slane %v275, %v279
    %282 = vmatprep.subr.mxu0 0.0
    %283 = vmatpush1.msra.mxu0 %v271
    %284 = vmatprep.subr.mxu0 0.0
    %285 = vmatpush1.msra.mxu0 %v272
    %286 = vmatprep.subr.mxu0 0.0
    %287 = vmatpush1.msra.mxu0 %v273
    %288 = vmatprep.subr.mxu0 0.0
    %289 = vmatpush1.msra.mxu0 %v274
    %290 = vmatprep.subr.mxu0 0.0
    %291 = vmatpush1.msra.mxu0 0.0
    %292 = vmatprep.subr.mxu0 0.0
    %293 = vmatpush1.msra.mxu0 0.0
    %294 = vmatprep.subr.mxu0 0.0
    %295 = vmatpush1.msra.mxu0 0.0
    %296 = vmatprep.subr.mxu0 0.0
    %297 = vmatpush1.msra.mxu0 0.0
    %298 = vmatprep.subr.mxu0 0.0
    %299 = vmatpush1.msra.mxu0 0.0
    %300 = vmatprep.subr.mxu0 0.0
    %301 = vmatpush1.msra.mxu0 0.0
    %302 = vmatprep.subr.mxu0 0.0
    %303 = vmatpush1.msra.mxu0 0.0
    %304 = vmatprep.subr.mxu0 0.0
    %305 = vmatpush1.msra.mxu0 0.0
    %306 = vmatprep.subr.mxu0 0.0
    %307 = vmatpush1.msra.mxu0 0.0
    %308 = vmatprep.subr.mxu0 0.0
    %309 = vmatpush1.msra.mxu0 0.0
    %310 = vmatprep.subr.mxu0 0.0
    %311 = vmatpush1.msra.mxu0 0.0
    %312 = vmatprep.subr.mxu0 0.0
    %313 = vmatpush1.msra.mxu0 0.0
    %314 = vmatprep.subr.mxu0 0.0
    %315 = vmatpush1.msra.mxu0 0.0
    %316 = vmatprep.subr.mxu0 0.0
    %317 = vmatpush1.msra.mxu0 0.0
    %318 = vmatprep.subr.mxu0 0.0
    %319 = vmatpush1.msra.mxu0 0.0
    %320 = vmatprep.subr.mxu0 0.0
    %321 = vmatpush1.msra.mxu0 0.0
    %322 = vmatprep.subr.mxu0 0.0
    %323 = vmatpush1.msra.mxu0 0.0
    %324 = vmatprep.subr.mxu0 0.0
    %325 = vmatpush1.msra.mxu0 0.0
    %326 = vmatprep.subr.mxu0 0.0
    %327 = vmatpush1.msra.mxu0 0.0
    %328 = vmatprep.subr.mxu0 0.0
    %329 = vmatpush1.msra.mxu0 0.0
    %330 = vmatprep.subr.mxu0 0.0
    %331 = vmatpush1.msra.mxu0 0.0
    %332 = vmatprep.subr.mxu0 0.0
    %333 = vmatpush1.msra.mxu0 0.0
    %334 = vmatprep.subr.mxu0 0.0
    %335 = vmatpush1.msra.mxu0 0.0
    %336 = vmatprep.subr.mxu0 0.0
    %337 = vmatpush1.msra.mxu0 0.0
    %338 = vmatprep.subr.mxu0 0.0
    %339 = vmatpush1.msra.mxu0 0.0
    %340 = vmatprep.subr.mxu0 0.0
    %341 = vmatpush1.msra.mxu0 0.0
    %342 = vmatprep.subr.mxu0 0.0
    %343 = vmatpush1.msra.mxu0 0.0
    %344 = vmatprep.subr.mxu0 0.0
    %345 = vmatpush1.msra.mxu0 0.0
    %346 = vmatprep.mubr.f32.mxu0 0.0
    %347 = vmatmul.mubr.f32.gmra.mrb[0].mxu0 %v101
    %v348 = vpop.f32.mrb[0].mxu0
    %v349 = vadd.f32 %v280, %v348
    %v350 = vpop.f32.mrb[0].mxu0
    %351 = vmatprep.mubr.f32.mxu0 0.0
    %352 = vmatmul.mubr.f32.gmra.mrb[0].mxu0 %v104
    %v353 = vpop.f32.mrb[0].mxu0
    %v354 = vadd.f32 %v280, %v353
    %v355 = vpop.f32.mrb[0].mxu0
    %356 = vdwg.mxu0
    %357 = vst.msk [vmem:[#allocation13] sm:$0xff] %vm99, %v349
    %358 = vst.msk [vmem:[#allocation13 + $0x8] sm:$0xff] %vm99, %v354
    // Predicated region
    $region46: #{tpu_custom_call.1} parent=1 // pred_check
      _
    $region47: #{tpu_custom_call.1} parent=1 // pred_check_branch
      %360 = sbr.rel (0) target = $region49
    $region48: #{tpu_custom_call.1} parent=1 // pred_region
      %s362 = ssub.s32 256, 256
      %363 = vsyncadd [#allocation4], %s362
      %s364 = sshll.u32 [#allocation10], 4
      %s365 = int_to_ptr.vmem [resolvable:$true] %s364
      %370 = dma.vmem_to_hbm [thread:$0]  %s365, 256, %s7, [#allocation4], 128, 128, 8
    $region49: #{tpu_custom_call.1} parent=1 // pred_fallthru
      _
    // Predicated region
    $region50: #{tpu_custom_call.1} parent=1 // pred_check
      _
    $region51: #{tpu_custom_call.1} parent=1 // pred_check_branch
      %372 = sbr.rel (0) target = $region53
    $region52: #{tpu_custom_call.1} parent=1 // pred_region
      %s374 = ssub.s32 256, 256
      %375 = vsyncadd [#allocation12], %s374
      %s376 = sshll.u32 [#allocation11], 4
      %s377 = int_to_ptr.vmem [resolvable:$true] %s376
      %382 = dma.vmem_to_hbm [thread:$0]  %s377, 256, %s8, [#allocation12], 128, 128, 8
    $region53: #{tpu_custom_call.1} parent=1 // pred_fallthru
      _
    // Predicated region
    $region54: #{tpu_custom_call.1} parent=1 // pred_check
      _
    $region55: #{tpu_custom_call.1} parent=1 // pred_check_branch
      %384 = sbr.rel (0) target = $region57
    $region56: #{tpu_custom_call.1} parent=1 // pred_region
      %s386 = ssub.s32 256, 256
      %387 = vsyncadd [#allocation12], %s386
      %s388 = sshll.u32 [#allocation13], 4
      %s389 = int_to_ptr.vmem [resolvable:$true] %s388
      %394 = dma.vmem_to_hbm [thread:$0]  %s389, 256, %s9, [#allocation12], 128, 128, 8
    $region57: #{tpu_custom_call.1} parent=1 // pred_fallthru
      _
    // Predicated region
    $region58: #{tpu_custom_call.1} parent=1 // pred_check
      _
    $region59: #{tpu_custom_call.1} parent=1 // pred_check_branch
      %396 = sbr.rel (0) target = $region61
    $region60: #{tpu_custom_call.1} parent=1 // pred_region
      %397 = dma.done [#allocation4], 256
    $region61: #{tpu_custom_call.1} parent=1 // pred_fallthru
      _
    // Predicated region
    $region62: #{tpu_custom_call.1} parent=1 // pred_check
      _
    $region63: #{tpu_custom_call.1} parent=1 // pred_check_branch
      %399 = sbr.rel (0) target = $region65
    $region64: #{tpu_custom_call.1} parent=1 // pred_region
      %400 = dma.done [#allocation12], 256
    $region65: #{tpu_custom_call.1} parent=1 // pred_fallthru
      _
    // Predicated region
    $region66: #{tpu_custom_call.1} parent=1 // pred_check
      _
    $region67: #{tpu_custom_call.1} parent=1 // pred_check_branch
      %402 = sbr.rel (0) target = $region69
    $region68: #{tpu_custom_call.1} parent=1 // pred_region
      %403 = dma.done [#allocation12], 256
    $region69: #{tpu_custom_call.1} parent=1 // pred_fallthru
      _
    %404 = vsyncpa [#allocation3], 1
    %405 = vsyncpa [#allocation6], 1
    %406 = vsyncpa [#allocation9], 1
    %407 = vsyncpa [#allocation4], 1
    %408 = vsyncpa [#allocation12], 1

</llo_original>
